<compile_context>
chip_gen: v7x
topology: tpu7x:2x2x1
jax: 0.10.0
libtpu: 0.0.40
codegen_flags: <defaults>
</compile_context>

<pallas_src>
import jax
import jax.numpy as jnp
from jax.experimental import pallas as pl
from jax.experimental.pallas import tpu as pltpu

STATE_SPACE = 8      # state_space
HIDDEN1 = 24         # layer1 out
HIDDEN2 = 12         # layer2 out
ACTION_SPACE = 4     # action_space

PAD_F = 128          # lane-padded feature dim for every layer
MAX_TILE_B = 1024    # batch-tile cap (keeps VMEM ~1 MiB worst case)


def dqn_mlp_kernel(x_ref, w_ref, b_ref, o_ref):
    """Fused 3-layer MLP on one batch tile.

    x_ref : (tile_b, STATE_SPACE) f32    streamed per grid step
    w_ref : (3, PAD_F, PAD_F)     bf16   VMEM-resident zero-padded weights
    b_ref : (3, PAD_F)            f32    VMEM-resident zero-padded biases
    o_ref : (tile_b, ACTION_SPACE) f32   dense Q-value block
    """
    x = x_ref[...]                                   # (tile_b, 8) f32

    # layer1 + ReLU -- only the 8 real input rows of W1 feed the MXU.
    w1 = w_ref[0, :STATE_SPACE, :]                   # (8, 128) bf16
    b1 = b_ref[0:1, :]                               # (1, 128) f32
    h = jnp.dot(x.astype(jnp.bfloat16), w1,
                preferred_element_type=jnp.float32) + b1
    h = jnp.maximum(h, 0.0)                          # padding lanes stay 0

    # layer2 + ReLU -- full 128x128 padded weight (extra rows/cols are 0).
    w2 = w_ref[1]                                    # (128, 128) bf16
    b2 = b_ref[1:2, :]
    h = jnp.dot(h.astype(jnp.bfloat16), w2,
                preferred_element_type=jnp.float32) + b2
    h = jnp.maximum(h, 0.0)

    # layer3 (no activation); only the real action lanes are written out.
    w3 = w_ref[2]
    b3 = b_ref[2:3, :]
    y = jnp.dot(h.astype(jnp.bfloat16), w3,
                preferred_element_type=jnp.float32) + b3

    o_ref[...] = y[:, :ACTION_SPACE].astype(o_ref.dtype)


def _pick_batch_tile(batch):
    """Largest tile that divides `batch` exactly (no pad / no tail masking).

    Prefers exactly 2 even, sublane-aligned tiles so the 'parallel' batch
    axis can split across both TensorCores on v7x; otherwise one tile
    covering the whole batch (block dim == full array dim, always legal).
    Halves further only to bound VMEM for huge batches.
    """
    tile = batch
    if batch % 16 == 0:
        tile = batch // 2
    while tile > MAX_TILE_B and tile % 16 == 0:
        tile //= 2
    return tile


def dqn_forward(x, w_slab, b_slab):
    """Batched forward. x: (batch, STATE_SPACE) f32 -> (batch, ACTION_SPACE)."""
    batch = x.shape[0]
    tile_b = _pick_batch_tile(batch)
    num_tiles = batch // tile_b

    return pl.pallas_call(
        dqn_mlp_kernel,
        out_shape=jax.ShapeDtypeStruct((batch, ACTION_SPACE), jnp.float32),
        grid=(num_tiles,),
        in_specs=[
            # activations stream one batch tile per grid step
            pl.BlockSpec((tile_b, STATE_SPACE), lambda i: (i, 0)),
            # parameter slabs: constant block index -> DMA'd once, VMEM-resident
            pl.BlockSpec((3, PAD_F, PAD_F), lambda i: (0, 0, 0)),
            pl.BlockSpec((3, PAD_F), lambda i: (0, 0)),
        ],
        out_specs=pl.BlockSpec((tile_b, ACTION_SPACE), lambda i: (i, 0)),
        compiler_params=pltpu.CompilerParams(
            dimension_semantics=("parallel",)),   # megacore split on v7x
    )(x, w_slab, b_slab)


def init_linear(key, fan_in, fan_out):
    """Deterministic init mimicking nn.Linear default: U(-1/sqrt(fan_in), +).

    Weight stored as (in, out) so y = x @ W (== x @ W_pt.T + b)."""
    kw, kb = jax.random.split(key)
    bound = 1.0 / (float(fan_in) ** 0.5)
    w = jax.random.uniform(kw, (fan_in, fan_out), jnp.float32, -bound, bound)
    b = jax.random.uniform(kb, (fan_out,), jnp.float32, -bound, bound)
    return w, b


def pack_params(layers):
    """Pack [(W, b)] * 3 into a bf16 weight slab + f32 bias slab (zero padded)."""
    w_slab = jnp.zeros((3, PAD_F, PAD_F), jnp.float32)
    b_slab = jnp.zeros((3, PAD_F), jnp.float32)
    for l, (w, b) in enumerate(layers):
        fin, fout = w.shape
        w_slab = w_slab.at[l, :fin, :fout].set(w)
        b_slab = b_slab.at[l, :fout].set(b)
    return w_slab.astype(jnp.bfloat16), b_slab


def reference_forward(x, layers):
    (w1, b1), (w2, b2), (w3, b3) = layers
    h1 = jnp.maximum(x @ w1 + b1, 0.0)
    h2 = jnp.maximum(h1 @ w2 + b2, 0.0)
    return h2 @ w3 + b3


if __name__ == "__main__":
    root = jax.random.PRNGKey(0)
    k_x, k1, k2, ks1, ks2, k3 = jax.random.split(root, 6)

    # Parameters used in forward.
    w1, b1 = init_linear(k1, STATE_SPACE, HIDDEN1)      # layer1
    w2, b2 = init_linear(k2, HIDDEN1, HIDDEN2)          # layer2
    w3, b3 = init_linear(k3, HIDDEN2, ACTION_SPACE)     # layer3
    # summary_layer1 / summary_layer2: declared in __init__, unused in forward.
    _sw1, _sb1 = init_linear(ks1, STATE_SPACE, HIDDEN1)
    _sw2, _sb2 = init_linear(ks2, HIDDEN1, HIDDEN2)

    layers = [(w1, b1), (w2, b2), (w3, b3)]
    w_slab, b_slab = pack_params(layers)

    # Replay-buffer-sized batch; splits into exactly 2 even tiles of 128 rows
    # (one per TensorCore on v7x, a 2-step pipeline elsewhere), no padding.
    batch = 256
    x = jax.random.normal(k_x, (batch, STATE_SPACE), jnp.float32)

    out = jax.block_until_ready(dqn_forward(x, w_slab, b_slab))

    ref = reference_forward(x, layers)                   # f32 reference
    assert out.shape == (batch, ACTION_SPACE), out.shape
    # bf16 matmul inputs vs f32 reference -> loosened tolerance.
    assert jnp.allclose(out, ref, atol=5e-2, rtol=5e-2), "mismatch vs reference"

    print("KERNEL_OK")
</pallas_src>

<mosaic_0001>
module attributes {stable_mosaic.version = 11 : i64} {
  func.func @dqn_mlp_kernel(%arg0: i32, %arg1: memref<128x8xf32, #tpu.memory_space<vmem>>, %arg2: memref<3x128x128xbf16, #tpu.memory_space<vmem>>, %arg3: memref<3x128xf32, #tpu.memory_space<vmem>>, %arg4: memref<128x4xf32, #tpu.memory_space<vmem>>) attributes {dimension_semantics = [#tpu.dimension_semantics<parallel>], iteration_bounds = array<i64: 2>, scalar_prefetch = 0 : i64, scratch_operands = 0 : i64, tpu.core_type = #tpu.core_type<tc>, window_params = [{transform_indices = @transform_0, window_bounds = array<i64: 128, 8>}, {pipeline_mode = #tpu.pipeline_mode<synchronous>, transform_indices = @transform_1, window_bounds = array<i64: 3, 128, 128>}, {pipeline_mode = #tpu.pipeline_mode<synchronous>, transform_indices = @transform_2, window_bounds = array<i64: 3, 128>}, {transform_indices = @transform_3, window_bounds = array<i64: 128, 4>}]} {
    %c0 = arith.constant 0 : index
    %c0_0 = arith.constant 0 : index
    %0 = vector.load %arg1[%c0, %c0_0] : memref<128x8xf32, #tpu.memory_space<vmem>>, vector<128x8xf32>
    %c0_1 = arith.constant 0 : index
    %c0_2 = arith.constant 0 : index
    %c0_3 = arith.constant 0 : index
    %1 = vector.load %arg2[%c0_1, %c0_2, %c0_3] : memref<3x128x128xbf16, #tpu.memory_space<vmem>>, vector<1x8x128xbf16>
    %2 = vector.shape_cast %1 : vector<1x8x128xbf16> to vector<8x128xbf16>
    %c0_4 = arith.constant 0 : index
    %c0_5 = arith.constant 0 : index
    %3 = vector.load %arg3[%c0_4, %c0_5] : memref<3x128xf32, #tpu.memory_space<vmem>>, vector<1x128xf32>
    %4 = arith.truncf %0 : vector<128x8xf32> to vector<128x8xbf16>
    %cst = arith.constant dense<0.000000e+00> : vector<128x128xf32>
    %5 = tpu.matmul %4, %2, %cst {dimension_numbers = #tpu.dot_dimension_numbers<[1], [0], [0], [1], [0, 0, 1, 1], [], []>} : vector<128x8xbf16>, vector<8x128xbf16>, vector<128x128xf32> -> vector<128x128xf32>
    %6 = vector.broadcast %3 : vector<1x128xf32> to vector<128x128xf32>
    %7 = arith.addf %5, %6 : vector<128x128xf32>
    %cst_6 = arith.constant 0.000000e+00 : f32
    %8 = vector.broadcast %cst_6 : f32 to vector<128x128xf32>
    %9 = arith.maximumf %7, %8 : vector<128x128xf32>
    %c1 = arith.constant 1 : index
    %c0_7 = arith.constant 0 : index
    %c0_8 = arith.constant 0 : index
    %10 = vector.load %arg2[%c1, %c0_7, %c0_8] : memref<3x128x128xbf16, #tpu.memory_space<vmem>>, vector<1x128x128xbf16>
    %11 = vector.shape_cast %10 : vector<1x128x128xbf16> to vector<128x128xbf16>
    %c1_9 = arith.constant 1 : index
    %c0_10 = arith.constant 0 : index
    %12 = vector.load %arg3[%c1_9, %c0_10] : memref<3x128xf32, #tpu.memory_space<vmem>>, vector<1x128xf32>
    %13 = arith.truncf %9 : vector<128x128xf32> to vector<128x128xbf16>
    %cst_11 = arith.constant dense<0.000000e+00> : vector<128x128xf32>
    %14 = tpu.matmul %13, %11, %cst_11 {dimension_numbers = #tpu.dot_dimension_numbers<[1], [0], [0], [1], [0, 0, 1, 1], [], []>} : vector<128x128xbf16>, vector<128x128xbf16>, vector<128x128xf32> -> vector<128x128xf32>
    %15 = vector.broadcast %12 : vector<1x128xf32> to vector<128x128xf32>
    %16 = arith.addf %14, %15 : vector<128x128xf32>
    %cst_12 = arith.constant 0.000000e+00 : f32
    %17 = vector.broadcast %cst_12 : f32 to vector<128x128xf32>
    %18 = arith.maximumf %16, %17 : vector<128x128xf32>
    %c2 = arith.constant 2 : index
    %c0_13 = arith.constant 0 : index
    %c0_14 = arith.constant 0 : index
    %19 = vector.load %arg2[%c2, %c0_13, %c0_14] : memref<3x128x128xbf16, #tpu.memory_space<vmem>>, vector<1x128x128xbf16>
    %20 = vector.shape_cast %19 : vector<1x128x128xbf16> to vector<128x128xbf16>
    %c2_15 = arith.constant 2 : index
    %c0_16 = arith.constant 0 : index
    %21 = vector.load %arg3[%c2_15, %c0_16] : memref<3x128xf32, #tpu.memory_space<vmem>>, vector<1x128xf32>
    %22 = arith.truncf %18 : vector<128x128xf32> to vector<128x128xbf16>
    %cst_17 = arith.constant dense<0.000000e+00> : vector<128x128xf32>
    %23 = tpu.matmul %22, %20, %cst_17 {dimension_numbers = #tpu.dot_dimension_numbers<[1], [0], [0], [1], [0, 0, 1, 1], [], []>} : vector<128x128xbf16>, vector<128x128xbf16>, vector<128x128xf32> -> vector<128x128xf32>
    %24 = vector.broadcast %21 : vector<1x128xf32> to vector<128x128xf32>
    %25 = arith.addf %23, %24 : vector<128x128xf32>
    %26 = vector.extract_strided_slice %25 {offsets = [0, 0], sizes = [128, 4], strides = [1, 1]} : vector<128x128xf32> to vector<128x4xf32>
    %c0_18 = arith.constant 0 : index
    %c0_19 = arith.constant 0 : index
    %27 = vector.load %arg4[%c0_18, %c0_19] : memref<128x4xf32, #tpu.memory_space<vmem>>, vector<128x4xf32>
    tpu.vector_store %arg4[%c0_18, %c0_19], %26 {strides = array<i32>} : memref<128x4xf32, #tpu.memory_space<vmem>>, vector<128x4xf32>,
    return
  }
  func.func @transform_0(%arg0: i32) -> (i32, i32) {
    %c0_i32 = arith.constant 0 : i32
    %c0_i32_0 = arith.constant 0 : i32
    return %arg0, %c0_i32 : i32, i32
  }
  func.func @transform_1(%arg0: i32) -> (i32, i32, i32) {
    %c0_i32 = arith.constant 0 : i32
    %c0_i32_0 = arith.constant 0 : i32
    %c0_i32_1 = arith.constant 0 : i32
    %c0_i32_2 = arith.constant 0 : i32
    return %c0_i32, %c0_i32_0, %c0_i32_1 : i32, i32, i32
  }
  func.func @transform_2(%arg0: i32) -> (i32, i32) {
    %c0_i32 = arith.constant 0 : i32
    %c0_i32_0 = arith.constant 0 : i32
    %c0_i32_1 = arith.constant 0 : i32
    return %c0_i32, %c0_i32_0 : i32, i32
  }
  func.func @transform_3(%arg0: i32) -> (i32, i32) {
    %c0_i32 = arith.constant 0 : i32
    %c0_i32_0 = arith.constant 0 : i32
    return %arg0, %c0_i32 : i32, i32
  }
}

</mosaic_0001>

<llo_original>
// kernel: tpu_custom_call.1
$region0: #{tpu_custom_call.1}
  #allocation0 [shape = 'u32[]', space=smem, size = 0x4, offset = 0x4, fixed_abs, tag = 'smem constant byte address 0x4 - core index']
  #allocation1 [shape = 'u32[144,128]{1,0:T(1,128)}', space=vmem, size = 0x12000, scoped, tag = 'internal scratch']
  %s0 = inlined_call_operand.vmem [shape: f32[256,8], index: 0, kind: input, shape index: {}]
  %s1 = inlined_call_operand.vmem [shape: bf16[3,128,128], index: 1, kind: input, shape index: {}]
  %s2 = inlined_call_operand.vmem [shape: f32[3,128], index: 2, kind: input, shape index: {}]
  %s3 = inlined_call_operand.vmem [shape: f32[256,4], index: 3, kind: output, shape index: {}]
  %s4 = sld [smem:[#allocation0]]
  $region45: #{tpu_custom_call.1} parent=0
    _
  %s6 = ssub.s32 1, %s4
  %s7 = scalar_select 0, %s6, %s4
  loop: start=0, step=1, limit=4
  $region2: #{tpu_custom_call.1} parent=0 // loop_pre_header
    _
  $region3: #{tpu_custom_call.1} parent=0 // loop_header
    %s9 = sphi 0, %s13
    %p10 = scmp.ge.s32.totalorder %s9, 4
    %s19 = sphi 0, %s21
    %s22 = sphi 0, %s19
    %s23 = sphi 0, %s22
    %s39 = sphi 0, %s23
    %s43 = sphi 0, %s43
    %s45 = sphi 0, %s43
    %s46 = sphi 0, %s45
    %s60 = sphi 0, %s46
    %s64 = sphi 0, %s64
    %s66 = sphi 0, %s64
    %s67 = sphi 0, %s66
    %s81 = sphi 0, %s67
    %s87 = sphi 0, %s89
    %s90 = sphi 0, %s87
    %s91 = sphi 0, %s90
    %s107 = sphi 0, %s91
  $region4: #{tpu_custom_call.1} parent=0 // loop_header_branch
    %12 = sbr.rel (%p10) target = $region8
  $region5: #{tpu_custom_call.1} parent=0 // loop_body
    %s14 = ssub.s32 %s9, 1
    %s15 = ssub.s32 %s9, 2
    %s16 = sadd.s32 %s9, 1
    %s17 = ssub.s32 %s9, %s16
    %p18 = scmp.eq.s32.totalorder %s17, 0
    %s20 = sadd.s32 %s19, 1
    %s21 = scalar_select %p18, %s19, %s20
    %p24 = pneg %p18
    %p25 = scmp.eq.s32.totalorder %s9, 1
    %p26 = por %p24, %p25
    %p27 = scmp.ne.s32.totalorder %s19, %s22
    %p28 = scmp.eq.s32.totalorder %s9, 0
    %p29 = por %p27, %p28
    %p30 = scmp.ne.s32.totalorder %s19, %s22
    %p31 = scmp.eq.s32.totalorder %s14, 1
    %p32 = por %p30, %p31
    %p33 = scmp.ne.s32.totalorder %s22, %s23
    %p34 = scmp.eq.s32.totalorder %s14, 0
    %p35 = por %p33, %p34
    %p36 = scmp.ne.s32.totalorder %s22, %s23
    %p37 = scmp.eq.s32.totalorder %s15, 1
    %p38 = por %p36, %p37
    %p40 = scmp.ne.s32.totalorder %s23, %s39
    %p41 = scmp.eq.s32.totalorder %s15, 0
    %p42 = por %p40, %p41
    %s44 = sadd.s32 %s43, 1
    %p47 = scmp.eq.s32.totalorder %s9, 1
    %p48 = scmp.ne.s32.totalorder %s43, %s45
    %p49 = scmp.eq.s32.totalorder %s9, 0
    %p50 = por %p48, %p49
    %p51 = scmp.ne.s32.totalorder %s43, %s45
    %p52 = scmp.eq.s32.totalorder %s14, 1
    %p53 = por %p51, %p52
    %p54 = scmp.ne.s32.totalorder %s45, %s46
    %p55 = scmp.eq.s32.totalorder %s14, 0
    %p56 = por %p54, %p55
    %p57 = scmp.ne.s32.totalorder %s45, %s46
    %p58 = scmp.eq.s32.totalorder %s15, 1
    %p59 = por %p57, %p58
    %p61 = scmp.ne.s32.totalorder %s46, %s60
    %p62 = scmp.eq.s32.totalorder %s15, 0
    %p63 = por %p61, %p62
    %s65 = sadd.s32 %s64, 1
    %p68 = scmp.eq.s32.totalorder %s9, 1
    %p69 = scmp.ne.s32.totalorder %s64, %s66
    %p70 = scmp.eq.s32.totalorder %s9, 0
    %p71 = por %p69, %p70
    %p72 = scmp.ne.s32.totalorder %s64, %s66
    %p73 = scmp.eq.s32.totalorder %s14, 1
    %p74 = por %p72, %p73
    %p75 = scmp.ne.s32.totalorder %s66, %s67
    %p76 = scmp.eq.s32.totalorder %s14, 0
    %p77 = por %p75, %p76
    %p78 = scmp.ne.s32.totalorder %s66, %s67
    %p79 = scmp.eq.s32.totalorder %s15, 1
    %p80 = por %p78, %p79
    %p82 = scmp.ne.s32.totalorder %s67, %s81
    %p83 = scmp.eq.s32.totalorder %s15, 0
    %p84 = por %p82, %p83
    %s85 = ssub.s32 %s9, %s16
    %p86 = scmp.eq.s32.totalorder %s85, 0
    %s88 = sadd.s32 %s87, 1
    %s89 = scalar_select %p86, %s87, %s88
    %p92 = pneg %p86
    %p93 = scmp.eq.s32.totalorder %s9, 1
    %p94 = por %p92, %p93
    %p95 = scmp.ne.s32.totalorder %s87, %s90
    %p96 = scmp.eq.s32.totalorder %s9, 0
    %p97 = por %p95, %p96
    %p98 = scmp.ne.s32.totalorder %s87, %s90
    %p99 = scmp.eq.s32.totalorder %s14, 1
    %p100 = por %p98, %p99
    %p101 = scmp.ne.s32.totalorder %s90, %s91
    %p102 = scmp.eq.s32.totalorder %s14, 0
    %p103 = por %p101, %p102
    %p104 = scmp.ne.s32.totalorder %s90, %s91
    %p105 = scmp.eq.s32.totalorder %s15, 1
    %p106 = por %p104, %p105
    %p108 = scmp.ne.s32.totalorder %s91, %s107
    %p109 = scmp.eq.s32.totalorder %s15, 0
    %p110 = por %p108, %p109
    %p111 = scmp.le.s32.totalorder 1, %s9
    %p112 = scmp.lt.s32.totalorder %s9, 3
    %p113 = pnand %p111, %p112
    %p114 = pneg %p113
    // Predicated region
    $region9: #{tpu_custom_call.1} parent=5 // pred_check
      _
    $region10: #{tpu_custom_call.1} parent=5 // pred_check_branch
      %116 = sbr.rel (%p113) target = $region12
    $region11: #{tpu_custom_call.1} parent=5 // pred_region
      %s117 = ssub.s32 %s9, 1
      // Predicated region
      $region13: #{tpu_custom_call.1} parent=11 // pred_check
        %p118 = pneg %p56
      $region14: #{tpu_custom_call.1} parent=11 // pred_check_branch
        %120 = sbr.rel (%p118) target = $region16
      $region15: #{tpu_custom_call.1} parent=11 // pred_region
        _
      $region16: #{tpu_custom_call.1} parent=11 // pred_fallthru
        _
      // Predicated region
      $region17: #{tpu_custom_call.1} parent=11 // pred_check
        %p121 = pneg %p77
      $region18: #{tpu_custom_call.1} parent=11 // pred_check_branch
        %123 = sbr.rel (%p121) target = $region20
      $region19: #{tpu_custom_call.1} parent=11 // pred_region
        _
      $region20: #{tpu_custom_call.1} parent=11 // pred_fallthru
        _
    $region12: #{tpu_custom_call.1} parent=5 // pred_fallthru
      _
    %p124 = scmp.lt.s32.totalorder %s9, 2
    // Predicated region
    $region21: #{tpu_custom_call.1} parent=5 // pred_check
      %p125 = pneg %p124
    $region22: #{tpu_custom_call.1} parent=5 // pred_check_branch
      %127 = sbr.rel (%p125) target = $region24
    $region23: #{tpu_custom_call.1} parent=5 // pred_region
      // Predicated region
      $region25: #{tpu_custom_call.1} parent=23 // pred_check
        %p128 = pneg %p29
      $region26: #{tpu_custom_call.1} parent=23 // pred_check_branch
        %130 = sbr.rel (%p128) target = $region28
      $region27: #{tpu_custom_call.1} parent=23 // pred_region
        %s131 = smul.u32 16, %s9
        %p132 = scmp.lt.s32.totalorder %s131, 31
        %s133 = scalar_select %p132, %s131, 31
        %s134 = smul.addr %s133, 8
        %s135 = scalar_lea.vmem %s0, %s134
        %s136 = smul.u32 16, %s9
      $region28: #{tpu_custom_call.1} parent=23 // pred_fallthru
        _
    $region24: #{tpu_custom_call.1} parent=5 // pred_fallthru
      _
    %p137 = scmp.le.s32.totalorder 1, %s9
    %p138 = scmp.lt.s32.totalorder %s9, 3
    %p139 = pnand %p137, %p138
    %p140 = pneg %p139
    // Predicated region
    $region29: #{tpu_custom_call.1} parent=5 // pred_check
      _
    $region30: #{tpu_custom_call.1} parent=5 // pred_check_branch
      %142 = sbr.rel (%p139) target = $region32
    $region31: #{tpu_custom_call.1} parent=5 // pred_region
      %s143 = ssub.s32 %s9, 1
      %s144 = smul.u32 16, %s14
      %p145 = scmp.lt.s32.totalorder %s144, 31
      %s146 = scalar_select %p145, %s144, 31
      %s147 = smul.addr %s146, 8
      %s148 = scalar_lea.vmem %s0, %s147
      %p149 = pneg %p35
      %p150 = pneg %p32
      %p151 = pneg %p56
      %p152 = pneg %p53
      %p153 = pneg %p77
      %p154 = pneg %p74
      %p155 = pneg %p103
      %p156 = pneg %p100
      %s157 = smul.u32 16, %s14
      %p158 = scmp.lt.s32.totalorder %s157, 31
      %s159 = scalar_select %p158, %s157, 31
      %s160 = smul.addr %s159, 8
      %s161 = scalar_lea.vmem %s3, %s160
      %s162 = smul.u32 16, %s14
      %p163 = scmp.lt.s32.totalorder %s162, 31
      %s164 = scalar_select %p163, %s162, 31
      %s165 = smul.addr %s164, 8
      %s166 = scalar_lea.vmem %s0, %s165
      %s167 = smul.u32 16, %s14
      %s168 = smul.u32 16, %s14
      %p169 = scmp.lt.s32.totalorder %s168, 31
      %s170 = scalar_select %p169, %s168, 31
      %s171 = smul.addr %s170, 8
      %s172 = scalar_lea.vmem %s3, %s171
      %s173 = smul.u32 16, %s14
      %v175 = vld [vmem:[%s166] sm:$0xff]
      %v176 = vld [vmem:[%s166 + $0x8] sm:$0xff]
      %v177 = vld [vmem:[%s166 + $0x10] sm:$0xff]
      %v178 = vld [vmem:[%s166 + $0x18] sm:$0xff]
      %v179 = vld [vmem:[%s166 + $0x20] sm:$0xff]
      %v180 = vld [vmem:[%s166 + $0x28] sm:$0xff]
      %v181 = vld [vmem:[%s166 + $0x30] sm:$0xff]
      %v182 = vld [vmem:[%s166 + $0x38] sm:$0xff]
      %v183 = vld [vmem:[%s166 + $0x40] sm:$0xff]
      %v184 = vld [vmem:[%s166 + $0x48] sm:$0xff]
      %v185 = vld [vmem:[%s166 + $0x50] sm:$0xff]
      %v186 = vld [vmem:[%s166 + $0x58] sm:$0xff]
      %v187 = vld [vmem:[%s166 + $0x60] sm:$0xff]
      %v188 = vld [vmem:[%s166 + $0x68] sm:$0xff]
      %v189 = vld [vmem:[%s166 + $0x70] sm:$0xff]
      %v190 = vld [vmem:[%s166 + $0x78] sm:$0xff]
      %v191 = vld [vmem:[%s1] sm:$0xf]
      %v192 = vld [vmem:[%s2] sm:$0x1]
      %v193 = vpack.c.bf16 %v176, %v175
      %v194 = vpack.c.bf16 %v178, %v177
      %v195 = vpack.c.bf16 %v180, %v179
      %v196 = vpack.c.bf16 %v182, %v181
      %v197 = vpack.c.bf16 %v184, %v183
      %v198 = vpack.c.bf16 %v186, %v185
      %v199 = vpack.c.bf16 %v188, %v187
      %v200 = vpack.c.bf16 %v190, %v189
      %v201 = vlaneseq
      %v202 = vshrl.u32 %v201, 7
      %v203 = vsub.s32 0, %v202
      %v204 = vrot.slane %v192, %v203
      %vm205 = vcmask 64512
      %v207 = vsel %vm205, %v193, 0
      %v210 = vsel %vm205, %v194, 0
      %v213 = vsel %vm205, %v195, 0
      %v216 = vsel %vm205, %v196, 0
      %v219 = vsel %vm205, %v197, 0
      %v222 = vsel %vm205, %v198, 0
      %v225 = vsel %vm205, %v199, 0
      %v228 = vsel %vm205, %v200, 0
      %vm230 = vcmask 1043456
      %v232 = vsel %vm230, %v191, 0
      %234 = vmatprep.subr.bf16.mxu0 0
      %235 = vmatpush1.bf16.msra.mxu0 %v232
      %236 = vmatprep.subr.bf16.mxu0 0
      %237 = vmatpush1.bf16.msra.mxu0 0
      %238 = vmatprep.subr.bf16.mxu0 0
      %239 = vmatpush1.bf16.msra.mxu0 0
      %240 = vmatprep.subr.bf16.mxu0 0
      %241 = vmatpush1.bf16.msra.mxu0 0
      %242 = vmatprep.subr.bf16.mxu0 0
      %243 = vmatpush1.bf16.msra.mxu0 0
      %244 = vmatprep.subr.bf16.mxu0 0
      %245 = vmatpush1.bf16.msra.mxu0 0
      %246 = vmatprep.subr.bf16.mxu0 0
      %247 = vmatpush1.bf16.msra.mxu0 0
      %248 = vmatprep.subr.bf16.mxu0 0
      %249 = vmatpush1.bf16.msra.mxu0 0
      %250 = vmatprep.subr.bf16.mxu0 0
      %251 = vmatpush1.bf16.msra.mxu0 0
      %252 = vmatprep.subr.bf16.mxu0 0
      %253 = vmatpush1.bf16.msra.mxu0 0
      %254 = vmatprep.subr.bf16.mxu0 0
      %255 = vmatpush1.bf16.msra.mxu0 0
      %256 = vmatprep.subr.bf16.mxu0 0
      %257 = vmatpush1.bf16.msra.mxu0 0
      %258 = vmatprep.subr.bf16.mxu0 0
      %259 = vmatpush1.bf16.msra.mxu0 0
      %260 = vmatprep.subr.bf16.mxu0 0
      %261 = vmatpush1.bf16.msra.mxu0 0
      %262 = vmatprep.subr.bf16.mxu0 0
      %263 = vmatpush1.bf16.msra.mxu0 0
      %264 = vmatprep.subr.bf16.mxu0 0
      %265 = vmatpush1.bf16.msra.mxu0 0
      %266 = vmatprep.mubr.bf16.mxu0 0
      %267 = vmatmul.mubr.bf16.gmra.mrb[0].mxu0 %v207
      %v268 = vpop.f32.mrb[0].mxu0
      %v269 = vadd.f32 %v204, %v268
      %v270 = vpop.f32.mrb[0].mxu0
      %v271 = vpop.f32.mrb[0].mxu0
      %v272 = vadd.f32 %v204, %v271
      %v273 = vpop.f32.mrb[0].mxu0
      %274 = vmatprep.mubr.bf16.mxu0 0
      %275 = vmatmul.mubr.bf16.gmra.mrb[0].mxu0 %v210
      %v276 = vpop.f32.mrb[0].mxu0
      %v277 = vadd.f32 %v204, %v276
      %v278 = vpop.f32.mrb[0].mxu0
      %v279 = vpop.f32.mrb[0].mxu0
      %v280 = vadd.f32 %v204, %v279
      %v281 = vpop.f32.mrb[0].mxu0
      %282 = vmatprep.mubr.bf16.mxu0 0
      %283 = vmatmul.mubr.bf16.gmra.mrb[0].mxu0 %v213
      %v284 = vpop.f32.mrb[0].mxu0
      %v285 = vadd.f32 %v204, %v284
      %v286 = vpop.f32.mrb[0].mxu0
      %v287 = vpop.f32.mrb[0].mxu0
      %v288 = vadd.f32 %v204, %v287
      %v289 = vpop.f32.mrb[0].mxu0
      %290 = vmatprep.mubr.bf16.mxu0 0
      %291 = vmatmul.mubr.bf16.gmra.mrb[0].mxu0 %v216
      %v292 = vpop.f32.mrb[0].mxu0
      %v293 = vadd.f32 %v204, %v292
      %v294 = vpop.f32.mrb[0].mxu0
      %v295 = vpop.f32.mrb[0].mxu0
      %v296 = vadd.f32 %v204, %v295
      %v297 = vpop.f32.mrb[0].mxu0
      %298 = vmatprep.mubr.bf16.mxu0 0
      %299 = vmatmul.mubr.bf16.gmra.mrb[0].mxu0 %v219
      %v300 = vpop.f32.mrb[0].mxu0
      %v301 = vadd.f32 %v204, %v300
      %v302 = vpop.f32.mrb[0].mxu0
      %v303 = vpop.f32.mrb[0].mxu0
      %v304 = vadd.f32 %v204, %v303
      %v305 = vpop.f32.mrb[0].mxu0
      %306 = vmatprep.mubr.bf16.mxu0 0
      %307 = vmatmul.mubr.bf16.gmra.mrb[0].mxu0 %v222
      %v308 = vpop.f32.mrb[0].mxu0
      %v309 = vadd.f32 %v204, %v308
      %v310 = vpop.f32.mrb[0].mxu0
      %v311 = vpop.f32.mrb[0].mxu0
      %v312 = vadd.f32 %v204, %v311
      %v313 = vpop.f32.mrb[0].mxu0
      %314 = vmatprep.mubr.bf16.mxu0 0
      %315 = vmatmul.mubr.bf16.gmra.mrb[0].mxu0 %v225
      %v316 = vpop.f32.mrb[0].mxu0
      %v317 = vadd.f32 %v204, %v316
      %v318 = vpop.f32.mrb[0].mxu0
      %v319 = vpop.f32.mrb[0].mxu0
      %v320 = vadd.f32 %v204, %v319
      %v321 = vpop.f32.mrb[0].mxu0
      %322 = vmatprep.mubr.bf16.mxu0 0
      %323 = vmatmul.mubr.bf16.gmra.mrb[0].mxu0 %v228
      %v324 = vpop.f32.mrb[0].mxu0
      %v325 = vadd.f32 %v204, %v324
      %v326 = vpop.f32.mrb[0].mxu0
      %v327 = vpop.f32.mrb[0].mxu0
      %v328 = vadd.f32 %v204, %v327
      %v329 = vpop.f32.mrb[0].mxu0
      %330 = vdwg.mxu0
      %v331 = vmax.f32 %v269, 0.0
      %v332 = vmax.f32 %v272, 0.0
      %v333 = vmax.f32 %v277, 0.0
      %v334 = vmax.f32 %v280, 0.0
      %v335 = vmax.f32 %v285, 0.0
      %v336 = vmax.f32 %v288, 0.0
      %v337 = vmax.f32 %v293, 0.0
      %v338 = vmax.f32 %v296, 0.0
      %v339 = vmax.f32 %v301, 0.0
      %v340 = vmax.f32 %v304, 0.0
      %v341 = vmax.f32 %v309, 0.0
      %v342 = vmax.f32 %v312, 0.0
      %v343 = vmax.f32 %v317, 0.0
      %v344 = vmax.f32 %v320, 0.0
      %v345 = vmax.f32 %v325, 0.0
      %v346 = vmax.f32 %v328, 0.0
      %s347 = scalar_lea.vmem %s1, 64
      %v348 = vld [vmem:[%s347] sm:$0xf]
      %v349 = vld [vmem:[%s347 + $0x4] sm:$0xf]
      %v350 = vld [vmem:[%s347 + $0x8] sm:$0xf]
      %v351 = vld [vmem:[%s347 + $0xc] sm:$0xf]
      %v352 = vld [vmem:[%s347 + $0x10] sm:$0xf]
      %v353 = vld [vmem:[%s347 + $0x14] sm:$0xf]
      %v354 = vld [vmem:[%s347 + $0x18] sm:$0xf]
      %v355 = vld [vmem:[%s347 + $0x1c] sm:$0xf]
      %v356 = vld [vmem:[%s347 + $0x20] sm:$0xf]
      %v357 = vld [vmem:[%s347 + $0x24] sm:$0xf]
      %v358 = vld [vmem:[%s347 + $0x28] sm:$0xf]
      %v359 = vld [vmem:[%s347 + $0x2c] sm:$0xf]
      %v360 = vld [vmem:[%s347 + $0x30] sm:$0xf]
      %v361 = vld [vmem:[%s347 + $0x34] sm:$0xf]
      %v362 = vld [vmem:[%s347 + $0x38] sm:$0xf]
      %v363 = vld [vmem:[%s347 + $0x3c] sm:$0xf]
      %v364 = vld [vmem:[%s2 + $0x1] sm:$0x1]
      %v365 = vpack.c.bf16 %v332, %v331
      %v366 = vpack.c.bf16 %v334, %v333
      %v367 = vpack.c.bf16 %v336, %v335
      %v368 = vpack.c.bf16 %v338, %v337
      %v369 = vpack.c.bf16 %v340, %v339
      %v370 = vpack.c.bf16 %v342, %v341
      %v371 = vpack.c.bf16 %v344, %v343
      %v372 = vpack.c.bf16 %v346, %v345
      %v373 = vlaneseq
      %v374 = vshrl.u32 %v373, 7
      %v375 = vsub.s32 0, %v374
      %v376 = vrot.slane %v364, %v375
      %v393 = vunpack.c.l.b16 %v348
      %v394 = vunpack.c.l.b16 %v349
      %v395 = vunpack.c.l.b16 %v350
      %v396 = vunpack.c.l.b16 %v351
      %v397 = vunpack.c.l.b16 %v352
      %v398 = vunpack.c.l.b16 %v353
      %v399 = vunpack.c.l.b16 %v354
      %v400 = vunpack.c.l.b16 %v355
      %v401 = vunpack.c.l.b16 %v356
      %v402 = vunpack.c.l.b16 %v357
      %v403 = vunpack.c.l.b16 %v358
      %v404 = vunpack.c.l.b16 %v359
      %v405 = vunpack.c.l.b16 %v360
      %v406 = vunpack.c.l.b16 %v361
      %v407 = vunpack.c.l.b16 %v362
      %v408 = vunpack.c.l.b16 %v363
      %v409 = vpack.c.b16 %v394, %v393
      %v410 = vpack.c.b16 %v396, %v395
      %v411 = vpack.c.b16 %v398, %v397
      %v412 = vpack.c.b16 %v400, %v399
      %v413 = vpack.c.b16 %v402, %v401
      %v414 = vpack.c.b16 %v404, %v403
      %v415 = vpack.c.b16 %v406, %v405
      %v416 = vpack.c.b16 %v408, %v407
      %425 = vmatprep.subr.bf16.mxu0 0
      %426 = vmatpush1.bf16.msra.mxu0 %v409
      %427 = vmatprep.subr.bf16.mxu0 0
      %428 = vmatpush1.bf16.msra.mxu0 %v410
      %429 = vmatprep.subr.bf16.mxu0 0
      %430 = vmatpush1.bf16.msra.mxu0 %v411
      %431 = vmatprep.subr.bf16.mxu0 0
      %432 = vmatpush1.bf16.msra.mxu0 %v412
      %433 = vmatprep.subr.bf16.mxu0 0
      %434 = vmatpush1.bf16.msra.mxu0 %v413
      %435 = vmatprep.subr.bf16.mxu0 0
      %436 = vmatpush1.bf16.msra.mxu0 %v414
      %437 = vmatprep.subr.bf16.mxu0 0
      %438 = vmatpush1.bf16.msra.mxu0 %v415
      %439 = vmatprep.subr.bf16.mxu0 0
      %440 = vmatpush1.bf16.msra.mxu0 %v416
      %441 = vmatprep.subr.bf16.mxu0 0
      %442 = vmatpush1.bf16.msra.mxu0 0
      %443 = vmatprep.subr.bf16.mxu0 0
      %444 = vmatpush1.bf16.msra.mxu0 0
      %445 = vmatprep.subr.bf16.mxu0 0
      %446 = vmatpush1.bf16.msra.mxu0 0
      %447 = vmatprep.subr.bf16.mxu0 0
      %448 = vmatpush1.bf16.msra.mxu0 0
      %449 = vmatprep.subr.bf16.mxu0 0
      %450 = vmatpush1.bf16.msra.mxu0 0
      %451 = vmatprep.subr.bf16.mxu0 0
      %452 = vmatpush1.bf16.msra.mxu0 0
      %453 = vmatprep.subr.bf16.mxu0 0
      %454 = vmatpush1.bf16.msra.mxu0 0
      %455 = vmatprep.subr.bf16.mxu0 0
      %456 = vmatpush1.bf16.msra.mxu0 0
      %457 = vmatprep.mubr.bf16.mxu0 0
      %458 = vmatmul.mubr.bf16.gmra.mrb[0].mxu0 %v365
      %v459 = vpop.f32.mrb[0].mxu0
      %v460 = vadd.f32 %v376, %v459
      %v461 = vpop.f32.mrb[0].mxu0
      %v462 = vpop.f32.mrb[0].mxu0
      %v463 = vadd.f32 %v376, %v462
      %v464 = vpop.f32.mrb[0].mxu0
      %465 = vmatprep.mubr.bf16.mxu0 0
      %466 = vmatmul.mubr.bf16.gmra.mrb[0].mxu0 %v366
      %v467 = vpop.f32.mrb[0].mxu0
      %v468 = vadd.f32 %v376, %v467
      %v469 = vpop.f32.mrb[0].mxu0
      %v470 = vpop.f32.mrb[0].mxu0
      %v471 = vadd.f32 %v376, %v470
      %v472 = vpop.f32.mrb[0].mxu0
      %473 = vmatprep.mubr.bf16.mxu0 0
      %474 = vmatmul.mubr.bf16.gmra.mrb[0].mxu0 %v367
      %v475 = vpop.f32.mrb[0].mxu0
      %v476 = vadd.f32 %v376, %v475
      %v477 = vpop.f32.mrb[0].mxu0
      %v478 = vpop.f32.mrb[0].mxu0
      %v479 = vadd.f32 %v376, %v478
      %v480 = vpop.f32.mrb[0].mxu0
      %481 = vmatprep.mubr.bf16.mxu0 0
      %482 = vmatmul.mubr.bf16.gmra.mrb[0].mxu0 %v368
      %v483 = vpop.f32.mrb[0].mxu0
      %v484 = vadd.f32 %v376, %v483
      %v485 = vpop.f32.mrb[0].mxu0
      %v486 = vpop.f32.mrb[0].mxu0
      %v487 = vadd.f32 %v376, %v486
      %v488 = vpop.f32.mrb[0].mxu0
      %489 = vmatprep.mubr.bf16.mxu0 0
      %490 = vmatmul.mubr.bf16.gmra.mrb[0].mxu0 %v369
      %v491 = vpop.f32.mrb[0].mxu0
      %v492 = vadd.f32 %v376, %v491
      %v493 = vpop.f32.mrb[0].mxu0
      %v494 = vpop.f32.mrb[0].mxu0
      %v495 = vadd.f32 %v376, %v494
      %v496 = vpop.f32.mrb[0].mxu0
      %497 = vmatprep.mubr.bf16.mxu0 0
      %498 = vmatmul.mubr.bf16.gmra.mrb[0].mxu0 %v370
      %v499 = vpop.f32.mrb[0].mxu0
      %v500 = vadd.f32 %v376, %v499
      %v501 = vpop.f32.mrb[0].mxu0
      %v502 = vpop.f32.mrb[0].mxu0
      %v503 = vadd.f32 %v376, %v502
      %v504 = vpop.f32.mrb[0].mxu0
      %505 = vmatprep.mubr.bf16.mxu0 0
      %506 = vmatmul.mubr.bf16.gmra.mrb[0].mxu0 %v371
      %v507 = vpop.f32.mrb[0].mxu0
      %v508 = vadd.f32 %v376, %v507
      %v509 = vpop.f32.mrb[0].mxu0
      %v510 = vpop.f32.mrb[0].mxu0
      %v511 = vadd.f32 %v376, %v510
      %v512 = vpop.f32.mrb[0].mxu0
      %513 = vmatprep.mubr.bf16.mxu0 0
      %514 = vmatmul.mubr.bf16.gmra.mrb[0].mxu0 %v372
      %v515 = vpop.f32.mrb[0].mxu0
      %v516 = vadd.f32 %v376, %v515
      %v517 = vpop.f32.mrb[0].mxu0
      %v518 = vpop.f32.mrb[0].mxu0
      %v519 = vadd.f32 %v376, %v518
      %v520 = vpop.f32.mrb[0].mxu0
      %521 = vdwg.mxu0
      %v522 = vmax.f32 %v460, 0.0
      %v523 = vmax.f32 %v463, 0.0
      %v524 = vmax.f32 %v468, 0.0
      %v525 = vmax.f32 %v471, 0.0
      %v526 = vmax.f32 %v476, 0.0
      %v527 = vmax.f32 %v479, 0.0
      %v528 = vmax.f32 %v484, 0.0
      %v529 = vmax.f32 %v487, 0.0
      %v530 = vmax.f32 %v492, 0.0
      %v531 = vmax.f32 %v495, 0.0
      %v532 = vmax.f32 %v500, 0.0
      %v533 = vmax.f32 %v503, 0.0
      %v534 = vmax.f32 %v508, 0.0
      %v535 = vmax.f32 %v511, 0.0
      %v536 = vmax.f32 %v516, 0.0
      %v537 = vmax.f32 %v519, 0.0
      %s538 = scalar_lea.vmem %s1, 128
      %v539 = vld [vmem:[%s538] sm:$0xf]
      %v540 = vld [vmem:[%s538 + $0x4] sm:$0xf]
      %v541 = vld [vmem:[%s538 + $0x8] sm:$0xf]
      %v542 = vld [vmem:[%s538 + $0xc] sm:$0xf]
      %v543 = vld [vmem:[%s538 + $0x10] sm:$0xf]
      %v544 = vld [vmem:[%s538 + $0x14] sm:$0xf]
      %v545 = vld [vmem:[%s538 + $0x18] sm:$0xf]
      %v546 = vld [vmem:[%s538 + $0x1c] sm:$0xf]
      %v547 = vld [vmem:[%s538 + $0x20] sm:$0xf]
      %v548 = vld [vmem:[%s538 + $0x24] sm:$0xf]
      %v549 = vld [vmem:[%s538 + $0x28] sm:$0xf]
      %v550 = vld [vmem:[%s538 + $0x2c] sm:$0xf]
      %v551 = vld [vmem:[%s538 + $0x30] sm:$0xf]
      %v552 = vld [vmem:[%s538 + $0x34] sm:$0xf]
      %v553 = vld [vmem:[%s538 + $0x38] sm:$0xf]
      %v554 = vld [vmem:[%s538 + $0x3c] sm:$0xf]
      %v555 = vld [vmem:[%s2 + $0x2] sm:$0x1]
      %v556 = vpack.c.bf16 %v523, %v522
      %v557 = vpack.c.bf16 %v525, %v524
      %v558 = vpack.c.bf16 %v527, %v526
      %v559 = vpack.c.bf16 %v529, %v528
      %v560 = vpack.c.bf16 %v531, %v530
      %v561 = vpack.c.bf16 %v533, %v532
      %v562 = vpack.c.bf16 %v535, %v534
      %v563 = vpack.c.bf16 %v537, %v536
      %v564 = vlaneseq
      %v565 = vshrl.u32 %v564, 7
      %v566 = vsub.s32 0, %v565
      %v567 = vrot.slane %v555, %v566
      %v584 = vunpack.c.l.b16 %v539
      %v585 = vunpack.c.l.b16 %v540
      %v586 = vunpack.c.l.b16 %v541
      %v587 = vunpack.c.l.b16 %v542
      %v588 = vunpack.c.l.b16 %v543
      %v589 = vunpack.c.l.b16 %v544
      %v590 = vunpack.c.l.b16 %v545
      %v591 = vunpack.c.l.b16 %v546
      %v592 = vunpack.c.l.b16 %v547
      %v593 = vunpack.c.l.b16 %v548
      %v594 = vunpack.c.l.b16 %v549
      %v595 = vunpack.c.l.b16 %v550
      %v596 = vunpack.c.l.b16 %v551
      %v597 = vunpack.c.l.b16 %v552
      %v598 = vunpack.c.l.b16 %v553
      %v599 = vunpack.c.l.b16 %v554
      %v600 = vpack.c.b16 %v585, %v584
      %v601 = vpack.c.b16 %v587, %v586
      %v602 = vpack.c.b16 %v589, %v588
      %v603 = vpack.c.b16 %v591, %v590
      %v604 = vpack.c.b16 %v593, %v592
      %v605 = vpack.c.b16 %v595, %v594
      %v606 = vpack.c.b16 %v597, %v596
      %v607 = vpack.c.b16 %v599, %v598
      %616 = vmatprep.subr.bf16.mxu0 0
      %617 = vmatpush1.bf16.msra.mxu0 %v600
      %618 = vmatprep.subr.bf16.mxu0 0
      %619 = vmatpush1.bf16.msra.mxu0 %v601
      %620 = vmatprep.subr.bf16.mxu0 0
      %621 = vmatpush1.bf16.msra.mxu0 %v602
      %622 = vmatprep.subr.bf16.mxu0 0
      %623 = vmatpush1.bf16.msra.mxu0 %v603
      %624 = vmatprep.subr.bf16.mxu0 0
      %625 = vmatpush1.bf16.msra.mxu0 %v604
      %626 = vmatprep.subr.bf16.mxu0 0
      %627 = vmatpush1.bf16.msra.mxu0 %v605
      %628 = vmatprep.subr.bf16.mxu0 0
      %629 = vmatpush1.bf16.msra.mxu0 %v606
      %630 = vmatprep.subr.bf16.mxu0 0
      %631 = vmatpush1.bf16.msra.mxu0 %v607
      %632 = vmatprep.subr.bf16.mxu0 0
      %633 = vmatpush1.bf16.msra.mxu0 0
      %634 = vmatprep.subr.bf16.mxu0 0
      %635 = vmatpush1.bf16.msra.mxu0 0
      %636 = vmatprep.subr.bf16.mxu0 0
      %637 = vmatpush1.bf16.msra.mxu0 0
      %638 = vmatprep.subr.bf16.mxu0 0
      %639 = vmatpush1.bf16.msra.mxu0 0
      %640 = vmatprep.subr.bf16.mxu0 0
      %641 = vmatpush1.bf16.msra.mxu0 0
      %642 = vmatprep.subr.bf16.mxu0 0
      %643 = vmatpush1.bf16.msra.mxu0 0
      %644 = vmatprep.subr.bf16.mxu0 0
      %645 = vmatpush1.bf16.msra.mxu0 0
      %646 = vmatprep.subr.bf16.mxu0 0
      %647 = vmatpush1.bf16.msra.mxu0 0
      %648 = vmatprep.mubr.bf16.mxu0 0
      %649 = vmatmul.mubr.bf16.gmra.mrb[0].mxu0 %v556
      %v650 = vpop.f32.mrb[0].mxu0
      %v651 = vadd.f32 %v567, %v650
      %v652 = vpop.f32.mrb[0].mxu0
      %v653 = vpop.f32.mrb[0].mxu0
      %v654 = vadd.f32 %v567, %v653
      %v655 = vpop.f32.mrb[0].mxu0
      %656 = vmatprep.mubr.bf16.mxu0 0
      %657 = vmatmul.mubr.bf16.gmra.mrb[0].mxu0 %v557
      %v658 = vpop.f32.mrb[0].mxu0
      %v659 = vadd.f32 %v567, %v658
      %v660 = vpop.f32.mrb[0].mxu0
      %v661 = vpop.f32.mrb[0].mxu0
      %v662 = vadd.f32 %v567, %v661
      %v663 = vpop.f32.mrb[0].mxu0
      %664 = vmatprep.mubr.bf16.mxu0 0
      %665 = vmatmul.mubr.bf16.gmra.mrb[0].mxu0 %v558
      %v666 = vpop.f32.mrb[0].mxu0
      %v667 = vadd.f32 %v567, %v666
      %v668 = vpop.f32.mrb[0].mxu0
      %v669 = vpop.f32.mrb[0].mxu0
      %v670 = vadd.f32 %v567, %v669
      %v671 = vpop.f32.mrb[0].mxu0
      %672 = vmatprep.mubr.bf16.mxu0 0
      %673 = vmatmul.mubr.bf16.gmra.mrb[0].mxu0 %v559
      %v674 = vpop.f32.mrb[0].mxu0
      %v675 = vadd.f32 %v567, %v674
      %v676 = vpop.f32.mrb[0].mxu0
      %v677 = vpop.f32.mrb[0].mxu0
      %v678 = vadd.f32 %v567, %v677
      %v679 = vpop.f32.mrb[0].mxu0
      %680 = vmatprep.mubr.bf16.mxu0 0
      %681 = vmatmul.mubr.bf16.gmra.mrb[0].mxu0 %v560
      %v682 = vpop.f32.mrb[0].mxu0
      %v683 = vadd.f32 %v567, %v682
      %v684 = vpop.f32.mrb[0].mxu0
      %v685 = vpop.f32.mrb[0].mxu0
      %v686 = vadd.f32 %v567, %v685
      %v687 = vpop.f32.mrb[0].mxu0
      %688 = vmatprep.mubr.bf16.mxu0 0
      %689 = vmatmul.mubr.bf16.gmra.mrb[0].mxu0 %v561
      %v690 = vpop.f32.mrb[0].mxu0
      %v691 = vadd.f32 %v567, %v690
      %v692 = vpop.f32.mrb[0].mxu0
      %v693 = vpop.f32.mrb[0].mxu0
      %v694 = vadd.f32 %v567, %v693
      %v695 = vpop.f32.mrb[0].mxu0
      %696 = vmatprep.mubr.bf16.mxu0 0
      %697 = vmatmul.mubr.bf16.gmra.mrb[0].mxu0 %v562
      %v698 = vpop.f32.mrb[0].mxu0
      %v699 = vadd.f32 %v567, %v698
      %v700 = vpop.f32.mrb[0].mxu0
      %v701 = vpop.f32.mrb[0].mxu0
      %v702 = vadd.f32 %v567, %v701
      %v703 = vpop.f32.mrb[0].mxu0
      %704 = vmatprep.mubr.bf16.mxu0 0
      %705 = vmatmul.mubr.bf16.gmra.mrb[0].mxu0 %v563
      %v706 = vpop.f32.mrb[0].mxu0
      %v707 = vadd.f32 %v567, %v706
      %v708 = vpop.f32.mrb[0].mxu0
      %v709 = vpop.f32.mrb[0].mxu0
      %v710 = vadd.f32 %v567, %v709
      %v711 = vpop.f32.mrb[0].mxu0
      %712 = vdwg.mxu0
      %vm713 = vcmask 31744
      %714 = vst.msk [vmem:[%s172] sm:$0xff] %vm713, %v651
      %715 = vst.msk [vmem:[%s172 + $0x8] sm:$0xff] %vm713, %v654
      %716 = vst.msk [vmem:[%s172 + $0x10] sm:$0xff] %vm713, %v659
      %717 = vst.msk [vmem:[%s172 + $0x18] sm:$0xff] %vm713, %v662
      %718 = vst.msk [vmem:[%s172 + $0x20] sm:$0xff] %vm713, %v667
      %719 = vst.msk [vmem:[%s172 + $0x28] sm:$0xff] %vm713, %v670
      %720 = vst.msk [vmem:[%s172 + $0x30] sm:$0xff] %vm713, %v675
      %721 = vst.msk [vmem:[%s172 + $0x38] sm:$0xff] %vm713, %v678
      %722 = vst.msk [vmem:[%s172 + $0x40] sm:$0xff] %vm713, %v683
      %723 = vst.msk [vmem:[%s172 + $0x48] sm:$0xff] %vm713, %v686
      %724 = vst.msk [vmem:[%s172 + $0x50] sm:$0xff] %vm713, %v691
      %725 = vst.msk [vmem:[%s172 + $0x58] sm:$0xff] %vm713, %v694
      %726 = vst.msk [vmem:[%s172 + $0x60] sm:$0xff] %vm713, %v699
      %727 = vst.msk [vmem:[%s172 + $0x68] sm:$0xff] %vm713, %v702
      %728 = vst.msk [vmem:[%s172 + $0x70] sm:$0xff] %vm713, %v707
      %729 = vst.msk [vmem:[%s172 + $0x78] sm:$0xff] %vm713, %v710
      %s730 = smul.u32 16, %s14
      %p731 = scmp.lt.s32.totalorder %s730, 31
      %s732 = scalar_select %p731, %s730, 31
      %s733 = smul.addr %s732, 8
      %s734 = scalar_lea.vmem %s3, %s733
      // Predicated region
      $region33: #{tpu_custom_call.1} parent=31 // pred_check
        %p735 = pneg %p100
      $region34: #{tpu_custom_call.1} parent=31 // pred_check_branch
        %737 = sbr.rel (%p735) target = $region36
      $region35: #{tpu_custom_call.1} parent=31 // pred_region
        %s738 = smul.u32 16, %s14
      $region36: #{tpu_custom_call.1} parent=31 // pred_fallthru
        _
    $region32: #{tpu_custom_call.1} parent=5 // pred_fallthru
      _
    %p739 = scmp.le.s32.totalorder 2, %s9
    // Predicated region
    $region37: #{tpu_custom_call.1} parent=5 // pred_check
      %p740 = pneg %p739
    $region38: #{tpu_custom_call.1} parent=5 // pred_check_branch
      %742 = sbr.rel (%p740) target = $region40
    $region39: #{tpu_custom_call.1} parent=5 // pred_region
      %s743 = ssub.s32 %s9, 2
      // Predicated region
      $region41: #{tpu_custom_call.1} parent=39 // pred_check
        %p744 = pneg %p106
      $region42: #{tpu_custom_call.1} parent=39 // pred_check_branch
        %746 = sbr.rel (%p744) target = $region44
      $region43: #{tpu_custom_call.1} parent=39 // pred_region
        %s747 = smul.u32 16, %s15
        %p748 = scmp.lt.s32.totalorder %s747, 31
        %s749 = scalar_select %p748, %s747, 31
        %s750 = smul.addr %s749, 8
        %s751 = scalar_lea.vmem %s3, %s750
      $region44: #{tpu_custom_call.1} parent=39 // pred_fallthru
        _
    $region40: #{tpu_custom_call.1} parent=5 // pred_fallthru
      _
  $region6: #{tpu_custom_call.1} parent=0 // loop_footer
    %s13 = sadd.s32 1, %s9
  $region7: #{tpu_custom_call.1} parent=0 // loop_footer_branch
    %8 = sbr.rel target = $region3
  $region8: #{tpu_custom_call.1} parent=0 // loop_exit
    _

</llo_original>
